<compile_context>
chip_gen: v6e
topology: v6e:2x2x1
jax: 0.10.0
libtpu: 0.0.40
codegen_flags: <defaults>
</compile_context>

<pallas_src>
import math

import jax
import jax.numpy as jnp
from jax import lax
from jax.experimental import pallas as pl
from jax.experimental.pallas import tpu as pltpu


def critic_mlp_kernel(x_ref, w1_ref, b1_ref, w2_ref, b2_ref, w3_ref, b3_ref, o_ref):
    """One batch tile of the critic MLP; activations live as (features, batch).

    x_ref  : (tile_b, n_states)  contiguous row-major input block (f32)
    w1_ref : (neurons, n_states) PyTorch-layout weight (compute dtype)
    b1_ref : (neurons, 1)        f32
    w2_ref : (neurons, neurons)  compute dtype
    b2_ref : (neurons, 1)        f32
    w3_ref : (neurons, 1)        output head weight column (f32)
    b3_ref : (1, 1) in SMEM      output head bias (f32 scalar)
    o_ref  : (1, tile_b)         lane-dense critic values for this tile
    """
    # Layer 1: Linear(n_states, neurons) + ReLU.  Contract on n_states so the
    # result lands directly as (neurons, tile_b) — no transpose needed.
    x = x_ref[...].astype(w1_ref.dtype)                           # (tile_b, n_states)
    h = lax.dot_general(w1_ref[...], x,
                        dimension_numbers=(((1,), (1,)), ((), ())),
                        preferred_element_type=jnp.float32)       # (neurons, tile_b)
    h = jnp.maximum(h + b1_ref[...], 0.0)

    # Layer 2: Linear(neurons, neurons) + ReLU.
    h = jnp.dot(w2_ref[...], h.astype(w2_ref.dtype),
                preferred_element_type=jnp.float32)               # (neurons, tile_b)
    h = jnp.maximum(h + b2_ref[...], 0.0)

    # Output head: Linear(neurons, 1) as VPU multiply + sublane (XLU) reduction.
    v = jnp.sum(h * w3_ref[...], axis=0, keepdims=True)           # (1, tile_b)
    o_ref[...] = (v + b3_ref[0, 0]).astype(o_ref.dtype)


def _round_up(x, m):
    return ((x + m - 1) // m) * m


def _choose_tile_b(batch, cap=1024):
    """Pick a batch-tile width: wide (amortize per-step overhead), 128-aligned,
    and giving >=2 tiles whenever the batch allows (v7x megacore)."""
    target = _round_up(max(1, -(-batch // 2)), 128)   # cdiv(B, 2) rounded to 128
    return max(128, min(cap, target))


def critic_forward_batched(states, params, *, tile_b=None,
                           compute_dtype=jnp.bfloat16):
    """Batched critic forward: states (B, n_states) -> values (B, 1)."""
    w1, b1, w2, b2, w3, b3 = params
    x = jnp.asarray(states, jnp.float32)
    B, n_states = x.shape
    neurons = w1.shape[0]

    if tile_b is None:
        tile_b = _choose_tile_b(B)
    n_tiles = -(-B // tile_b)
    b_pad = n_tiles * tile_b
    if b_pad != B:
        x = jnp.pad(x, ((0, b_pad - B), (0, 0)))

    # Constant index_map => weight/bias blocks are VMEM-resident across tiles.
    resident = lambda shape: pl.BlockSpec(shape, lambda i: (0, 0))

    out = pl.pallas_call(
        critic_mlp_kernel,
        out_shape=jax.ShapeDtypeStruct((1, b_pad), jnp.float32),
        grid=(n_tiles,),
        in_specs=[
            pl.BlockSpec((tile_b, n_states), lambda i: (i, 0)),   # streamed input
            resident((neurons, n_states)),                        # W1 (resident)
            resident((neurons, 1)),                               # b1
            resident((neurons, neurons)),                         # W2 (resident)
            resident((neurons, 1)),                               # b2
            resident((neurons, 1)),                               # W3 head column
            pl.BlockSpec(memory_space=pltpu.MemorySpace.SMEM),    # b3 scalar
        ],
        out_specs=pl.BlockSpec((1, tile_b), lambda i: (0, i)),    # lane-dense
        compiler_params=pltpu.CompilerParams(
            dimension_semantics=("parallel",)),
    )(
        x,
        w1.astype(compute_dtype), b1.astype(jnp.float32),
        w2.astype(compute_dtype), b2.astype(jnp.float32),
        w3.astype(jnp.float32), b3.astype(jnp.float32),
    )

    return out[0, :B].reshape(B, 1)


def critic_forward(state, params, **kw):
    """Mirror of CriticNetwork.forward for a single state: flatten -> (1,)."""
    x = jnp.asarray(state, jnp.float32).reshape(1, -1)
    return critic_forward_batched(x, params, **kw).reshape(1)


def xavier_uniform(key, out_features, in_features, dtype=jnp.float32):
    """torch.nn.init.xavier_uniform_ on a (out, in) Linear weight."""
    bound = math.sqrt(6.0 / (in_features + out_features))
    return jax.random.uniform(key, (out_features, in_features), dtype=dtype,
                              minval=-bound, maxval=bound)


def init_critic_params(key, n_states, layers=1, neurons=128):
    assert layers == 1, "this script instantiates the layers=1, int-neurons case"
    k1, k2, k3 = jax.random.split(key, 3)
    w1 = xavier_uniform(k1, neurons, n_states)             # (neurons, n_states)
    b1 = jnp.zeros((neurons, 1), jnp.float32)
    w2 = xavier_uniform(k2, neurons, neurons)              # (neurons, neurons)
    b2 = jnp.zeros((neurons, 1), jnp.float32)
    # Head weight stored as a column (neurons, 1); xavier bound is symmetric.
    w3 = xavier_uniform(k3, 1, neurons).reshape(neurons, 1)
    b3 = jnp.zeros((1, 1), jnp.float32)
    return (w1, b1, w2, b2, w3, b3)


def critic_forward_ref(states_2d, params):
    """Pure-JAX reference (batched), matching the PyTorch network."""
    w1, b1, w2, b2, w3, b3 = params
    x = jnp.asarray(states_2d, jnp.float32)
    h = jnp.maximum(x @ w1.T + b1[:, 0], 0.0)
    h = jnp.maximum(h @ w2.T + b2[:, 0], 0.0)
    return h @ w3 + b3[0, 0]                               # (B, 1)


if __name__ == "__main__":
    n_states = 32
    neurons = 128
    layers = 1
    batch = 8

    key = jax.random.PRNGKey(0)
    kp, kx, kb, kc = jax.random.split(key, 4)

    params = init_critic_params(kp, n_states, layers=layers, neurons=neurons)

    # Single state, exactly mirroring CriticNetwork.forward (flatten -> (1,)),
    # run in exact f32 to match the reference tightly.
    state = jax.random.normal(kx, (n_states,), dtype=jnp.float32)
    value = jax.block_until_ready(
        critic_forward(state, params, compute_dtype=jnp.float32))
    ref_single = critic_forward_ref(state.reshape(1, -1), params).reshape(1)
    assert value.shape == (1,)
    assert jnp.allclose(value, ref_single, atol=1e-4, rtol=1e-4), (value, ref_single)

    # Small batch, f32 MXU operands (tight tolerance).
    states = jax.random.normal(kb, (batch, n_states), dtype=jnp.float32)
    ref_batch = critic_forward_ref(states, params)
    values_f32 = jax.block_until_ready(
        critic_forward_batched(states, params, compute_dtype=jnp.float32))
    assert values_f32.shape == (batch, 1)
    assert jnp.allclose(values_f32, ref_batch, atol=1e-4, rtol=1e-4), (
        values_f32, ref_batch)

    # Default path: bf16 MXU operands with f32 accumulation (all generations).
    values_bf16 = jax.block_until_ready(critic_forward_batched(states, params))
    assert values_bf16.shape == (batch, 1)
    assert jnp.allclose(values_bf16, ref_batch, atol=5e-2, rtol=5e-2), (
        values_bf16, ref_batch)

    # Larger ragged batch: exercises multi-tile grid + tail padding/slice-off.
    states_big = jax.random.normal(kc, (300, n_states), dtype=jnp.float32)
    ref_big = critic_forward_ref(states_big, params)
    values_big = jax.block_until_ready(critic_forward_batched(states_big, params))
    assert values_big.shape == (300, 1)
    assert jnp.allclose(values_big, ref_big, atol=5e-2, rtol=5e-2)

    print("KERNEL_OK")
</pallas_src>

<mosaic_0001>
module attributes {stable_mosaic.version = 11 : i64} {
  func.func @critic_mlp_kernel(%arg0: i32, %arg1: memref<128x32xf32, #tpu.memory_space<vmem>>, %arg2: memref<128x32xf32, #tpu.memory_space<vmem>>, %arg3: memref<128x1xf32, #tpu.memory_space<vmem>>, %arg4: memref<128x128xf32, #tpu.memory_space<vmem>>, %arg5: memref<128x1xf32, #tpu.memory_space<vmem>>, %arg6: memref<128x1xf32, #tpu.memory_space<vmem>>, %arg7: memref<1x1xf32, #tpu.memory_space<smem>>, %arg8: memref<1x128xf32, #tpu.memory_space<vmem>>) attributes {dimension_semantics = [#tpu.dimension_semantics<parallel>], iteration_bounds = array<i64: 1>, scalar_prefetch = 0 : i64, scratch_operands = 0 : i64, tpu.core_type = #tpu.core_type<tc>, window_params = [{transform_indices = @transform_0, window_bounds = array<i64: 128, 32>}, {pipeline_mode = #tpu.pipeline_mode<synchronous>, transform_indices = @transform_1, window_bounds = array<i64: 128, 32>}, {pipeline_mode = #tpu.pipeline_mode<synchronous>, transform_indices = @transform_2, window_bounds = array<i64: 128, 1>}, {pipeline_mode = #tpu.pipeline_mode<synchronous>, transform_indices = @transform_3, window_bounds = array<i64: 128, 128>}, {pipeline_mode = #tpu.pipeline_mode<synchronous>, transform_indices = @transform_4, window_bounds = array<i64: 128, 1>}, {pipeline_mode = #tpu.pipeline_mode<synchronous>, transform_indices = @transform_5, window_bounds = array<i64: 128, 1>}, {transform_indices = @transform_6, window_bounds = array<i64: 1, 1>}, {transform_indices = @transform_7, window_bounds = array<i64: 1, 128>}]} {
    %c0 = arith.constant 0 : index
    %c0_0 = arith.constant 0 : index
    %0 = vector.load %arg1[%c0, %c0_0] : memref<128x32xf32, #tpu.memory_space<vmem>>, vector<128x32xf32>
    %c0_1 = arith.constant 0 : index
    %c0_2 = arith.constant 0 : index
    %1 = vector.load %arg2[%c0_1, %c0_2] : memref<128x32xf32, #tpu.memory_space<vmem>>, vector<128x32xf32>
    %cst = arith.constant dense<0.000000e+00> : vector<128x128xf32>
    %2 = tpu.matmul %1, %0, %cst {dimension_numbers = #tpu.dot_dimension_numbers<[1], [1], [0], [0], [0, 0, 1, 0], [], []>} : vector<128x32xf32>, vector<128x32xf32>, vector<128x128xf32> -> vector<128x128xf32>
    %c0_3 = arith.constant 0 : index
    %c0_4 = arith.constant 0 : index
    %3 = vector.load %arg3[%c0_3, %c0_4] : memref<128x1xf32, #tpu.memory_space<vmem>>, vector<128x1xf32>
    %4 = vector.broadcast %3 : vector<128x1xf32> to vector<128x128xf32>
    %5 = arith.addf %2, %4 : vector<128x128xf32>
    %cst_5 = arith.constant 0.000000e+00 : f32
    %6 = vector.broadcast %cst_5 : f32 to vector<128x128xf32>
    %7 = arith.maximumf %5, %6 : vector<128x128xf32>
    %c0_6 = arith.constant 0 : index
    %c0_7 = arith.constant 0 : index
    %8 = vector.load %arg4[%c0_6, %c0_7] : memref<128x128xf32, #tpu.memory_space<vmem>>, vector<128x128xf32>
    %cst_8 = arith.constant dense<0.000000e+00> : vector<128x128xf32>
    %9 = tpu.matmul %8, %7, %cst_8 {dimension_numbers = #tpu.dot_dimension_numbers<[1], [0], [0], [1], [0, 0, 1, 1], [], []>} : vector<128x128xf32>, vector<128x128xf32>, vector<128x128xf32> -> vector<128x128xf32>
    %c0_9 = arith.constant 0 : index
    %c0_10 = arith.constant 0 : index
    %10 = vector.load %arg5[%c0_9, %c0_10] : memref<128x1xf32, #tpu.memory_space<vmem>>, vector<128x1xf32>
    %11 = vector.broadcast %10 : vector<128x1xf32> to vector<128x128xf32>
    %12 = arith.addf %9, %11 : vector<128x128xf32>
    %cst_11 = arith.constant 0.000000e+00 : f32
    %13 = vector.broadcast %cst_11 : f32 to vector<128x128xf32>
    %14 = arith.maximumf %12, %13 : vector<128x128xf32>
    %c0_12 = arith.constant 0 : index
    %c0_13 = arith.constant 0 : index
    %15 = vector.load %arg6[%c0_12, %c0_13] : memref<128x1xf32, #tpu.memory_space<vmem>>, vector<128x1xf32>
    %16 = vector.broadcast %15 : vector<128x1xf32> to vector<128x128xf32>
    %17 = arith.mulf %14, %16 : vector<128x128xf32>
    %cst_14 = arith.constant dense<0.000000e+00> : vector<128xf32>
    %18 = vector.multi_reduction <add>, %17, %cst_14 [0] : vector<128x128xf32> to vector<128xf32>
    %19 = vector.shape_cast %18 : vector<128xf32> to vector<1x128xf32>
    %c0_15 = arith.constant 0 : index
    %c0_16 = arith.constant 0 : index
    %20 = memref.load %arg7[%c0_15, %c0_16] : memref<1x1xf32, #tpu.memory_space<smem>>
    %21 = vector.broadcast %20 : f32 to vector<1x128xf32>
    %22 = arith.addf %19, %21 : vector<1x128xf32>
    %c0_17 = arith.constant 0 : index
    %c0_18 = arith.constant 0 : index
    %23 = vector.load %arg8[%c0_17, %c0_18] : memref<1x128xf32, #tpu.memory_space<vmem>>, vector<1x128xf32>
    tpu.vector_store %arg8[%c0_17, %c0_18], %22 {strides = array<i32>} : memref<1x128xf32, #tpu.memory_space<vmem>>, vector<1x128xf32>,
    return
  }
  func.func @transform_0(%arg0: i32) -> (i32, i32) {
    %c0_i32 = arith.constant 0 : i32
    %c0_i32_0 = arith.constant 0 : i32
    return %arg0, %c0_i32 : i32, i32
  }
  func.func @transform_1(%arg0: i32) -> (i32, i32) {
    %c0_i32 = arith.constant 0 : i32
    %c0_i32_0 = arith.constant 0 : i32
    %c0_i32_1 = arith.constant 0 : i32
    return %c0_i32, %c0_i32_0 : i32, i32
  }
  func.func @transform_2(%arg0: i32) -> (i32, i32) {
    %c0_i32 = arith.constant 0 : i32
    %c0_i32_0 = arith.constant 0 : i32
    %c0_i32_1 = arith.constant 0 : i32
    return %c0_i32, %c0_i32_0 : i32, i32
  }
  func.func @transform_3(%arg0: i32) -> (i32, i32) {
    %c0_i32 = arith.constant 0 : i32
    %c0_i32_0 = arith.constant 0 : i32
    %c0_i32_1 = arith.constant 0 : i32
    return %c0_i32, %c0_i32_0 : i32, i32
  }
  func.func @transform_4(%arg0: i32) -> (i32, i32) {
    %c0_i32 = arith.constant 0 : i32
    %c0_i32_0 = arith.constant 0 : i32
    %c0_i32_1 = arith.constant 0 : i32
    return %c0_i32, %c0_i32_0 : i32, i32
  }
  func.func @transform_5(%arg0: i32) -> (i32, i32) {
    %c0_i32 = arith.constant 0 : i32
    %c0_i32_0 = arith.constant 0 : i32
    %c0_i32_1 = arith.constant 0 : i32
    return %c0_i32, %c0_i32_0 : i32, i32
  }
  func.func @transform_6(%arg0: i32) -> (i32, i32) {
    %c0_i32 = arith.constant 0 : i32
    %c0_i32_0 = arith.constant 0 : i32
    %c0_i32_1 = arith.constant 0 : i32
    return %c0_i32, %c0_i32_0 : i32, i32
  }
  func.func @transform_7(%arg0: i32) -> (i32, i32) {
    %c0_i32 = arith.constant 0 : i32
    %c0_i32_0 = arith.constant 0 : i32
    return %c0_i32, %arg0 : i32, i32
  }
}

</mosaic_0001>

<llo_original>
// kernel: tpu_custom_call.1
$region0: #{tpu_custom_call.1}
  #allocation0 [shape = 'u32[]', space=smem, size = 0x4, offset = 0x4, fixed_abs, tag = 'smem constant byte address 0x4 - core index']
  #allocation1 [shape = 'u32[144,128]{1,0:T(1,128)}', space=vmem, size = 0x12000, scoped, tag = 'internal scratch']
  #allocation2 [shape = 'f32[1,1]{1,0:T(1,128)S(6)}', space=smem, size = 0x200, scoped, tag = 'scoped memory for tpu_custom_call.1']
  %s0 = inlined_call_operand.vmem [shape: f32[128,32], index: 0, kind: input, shape index: {}]
  %s1 = inlined_call_operand.vmem [shape: f32[128,32], index: 1, kind: input, shape index: {}]
  %s2 = inlined_call_operand.vmem [shape: f32[128,1], index: 2, kind: input, shape index: {}]
  %s3 = inlined_call_operand.vmem [shape: f32[128,128], index: 3, kind: input, shape index: {}]
  %s4 = inlined_call_operand.vmem [shape: f32[128,1], index: 4, kind: input, shape index: {}]
  %s5 = inlined_call_operand.vmem [shape: f32[128,1], index: 5, kind: input, shape index: {}]
  %s6 = inlined_call_operand.<no memory space> [shape: f32[1,1], index: 6, kind: input, shape index: {}]
  %s7 = inlined_call_operand.hbm [shape: f32[1,128], index: 7, kind: output, shape index: {}]
  %s8 = sld [smem:[#allocation0]]
  $region38: #{tpu_custom_call.1} parent=0
    _
  %s10 = ssub.s32 1, %s8
  %s11 = scalar_select 0, %s10, %s8
  %12 = sst [smem:[#allocation2]] %s6
  $region1: #{tpu_custom_call.1} parent=0
    #allocation3 [shape = 'u8[512]{0}', space=vmem, size = 0x400, scoped, tag = 'output window, operand 0, single buffered']
    #allocation4 [shape = 's32[1]{0}', space=sflag, size = 0x4, scoped, tag = 'scoped memory for tpu_custom_call.1']
    %13 = vsyncpa [#allocation4], 0
    // Predicated region
    $region2: #{tpu_custom_call.1} parent=1 // pred_check
      _
    $region3: #{tpu_custom_call.1} parent=1 // pred_check_branch
      %15 = sbr.rel (0) target = $region5
    $region4: #{tpu_custom_call.1} parent=1 // pred_region
      _
    $region5: #{tpu_custom_call.1} parent=1 // pred_fallthru
      _
    // Predicated region
    $region6: #{tpu_custom_call.1} parent=1 // pred_check
      _
    $region7: #{tpu_custom_call.1} parent=1 // pred_check_branch
      %17 = sbr.rel (0) target = $region9
    $region8: #{tpu_custom_call.1} parent=1 // pred_region
      _
    $region9: #{tpu_custom_call.1} parent=1 // pred_fallthru
      _
    // Predicated region
    $region10: #{tpu_custom_call.1} parent=1 // pred_check
      _
    $region11: #{tpu_custom_call.1} parent=1 // pred_check_branch
      %19 = sbr.rel (0) target = $region13
    $region12: #{tpu_custom_call.1} parent=1 // pred_region
      _
    $region13: #{tpu_custom_call.1} parent=1 // pred_fallthru
      _
    // Predicated region
    $region14: #{tpu_custom_call.1} parent=1 // pred_check
      _
    $region15: #{tpu_custom_call.1} parent=1 // pred_check_branch
      %21 = sbr.rel (0) target = $region17
    $region16: #{tpu_custom_call.1} parent=1 // pred_region
      _
    $region17: #{tpu_custom_call.1} parent=1 // pred_fallthru
      _
    // Predicated region
    $region18: #{tpu_custom_call.1} parent=1 // pred_check
      _
    $region19: #{tpu_custom_call.1} parent=1 // pred_check_branch
      %23 = sbr.rel (0) target = $region21
    $region20: #{tpu_custom_call.1} parent=1 // pred_region
      _
    $region21: #{tpu_custom_call.1} parent=1 // pred_fallthru
      _
    // Predicated region
    $region22: #{tpu_custom_call.1} parent=1 // pred_check
      _
    $region23: #{tpu_custom_call.1} parent=1 // pred_check_branch
      %25 = sbr.rel (0) target = $region25
    $region24: #{tpu_custom_call.1} parent=1 // pred_region
      _
    $region25: #{tpu_custom_call.1} parent=1 // pred_fallthru
      _
    // Predicated region
    $region26: #{tpu_custom_call.1} parent=1 // pred_check
      _
    $region27: #{tpu_custom_call.1} parent=1 // pred_check_branch
      %27 = sbr.rel (0) target = $region29
    $region28: #{tpu_custom_call.1} parent=1 // pred_region
      _
    $region29: #{tpu_custom_call.1} parent=1 // pred_fallthru
      _
    %v28 = vld [vmem:[%s0] sm:$0xff]
    %v29 = vld [vmem:[%s0 + $0x8] sm:$0xff]
    %v30 = vld [vmem:[%s0 + $0x10] sm:$0xff]
    %v31 = vld [vmem:[%s0 + $0x18] sm:$0xff]
    %v32 = vld [vmem:[%s0 + $0x20] sm:$0xff]
    %v33 = vld [vmem:[%s0 + $0x28] sm:$0xff]
    %v34 = vld [vmem:[%s0 + $0x30] sm:$0xff]
    %v35 = vld [vmem:[%s0 + $0x38] sm:$0xff]
    %v36 = vld [vmem:[%s0 + $0x40] sm:$0xff]
    %v37 = vld [vmem:[%s0 + $0x48] sm:$0xff]
    %v38 = vld [vmem:[%s0 + $0x50] sm:$0xff]
    %v39 = vld [vmem:[%s0 + $0x58] sm:$0xff]
    %v40 = vld [vmem:[%s0 + $0x60] sm:$0xff]
    %v41 = vld [vmem:[%s0 + $0x68] sm:$0xff]
    %v42 = vld [vmem:[%s0 + $0x70] sm:$0xff]
    %v43 = vld [vmem:[%s0 + $0x78] sm:$0xff]
    %v44 = vld [vmem:[%s1] sm:$0xff]
    %v45 = vld [vmem:[%s1 + $0x8] sm:$0xff]
    %v46 = vld [vmem:[%s1 + $0x10] sm:$0xff]
    %v47 = vld [vmem:[%s1 + $0x18] sm:$0xff]
    %v48 = vld [vmem:[%s1 + $0x20] sm:$0xff]
    %v49 = vld [vmem:[%s1 + $0x28] sm:$0xff]
    %v50 = vld [vmem:[%s1 + $0x30] sm:$0xff]
    %v51 = vld [vmem:[%s1 + $0x38] sm:$0xff]
    %v52 = vld [vmem:[%s1 + $0x40] sm:$0xff]
    %v53 = vld [vmem:[%s1 + $0x48] sm:$0xff]
    %v54 = vld [vmem:[%s1 + $0x50] sm:$0xff]
    %v55 = vld [vmem:[%s1 + $0x58] sm:$0xff]
    %v56 = vld [vmem:[%s1 + $0x60] sm:$0xff]
    %v57 = vld [vmem:[%s1 + $0x68] sm:$0xff]
    %v58 = vld [vmem:[%s1 + $0x70] sm:$0xff]
    %v59 = vld [vmem:[%s1 + $0x78] sm:$0xff]
    %v60 = vld [vmem:[%s2] sm:$0xff]
    %v61 = vld [vmem:[%s2 + $0x8] sm:$0xff]
    %v62 = vld [vmem:[%s2 + $0x10] sm:$0xff]
    %v63 = vld [vmem:[%s2 + $0x18] sm:$0xff]
    %v64 = vld [vmem:[%s2 + $0x20] sm:$0xff]
    %v65 = vld [vmem:[%s2 + $0x28] sm:$0xff]
    %v66 = vld [vmem:[%s2 + $0x30] sm:$0xff]
    %v67 = vld [vmem:[%s2 + $0x38] sm:$0xff]
    %v68 = vld [vmem:[%s2 + $0x40] sm:$0xff]
    %v69 = vld [vmem:[%s2 + $0x48] sm:$0xff]
    %v70 = vld [vmem:[%s2 + $0x50] sm:$0xff]
    %v71 = vld [vmem:[%s2 + $0x58] sm:$0xff]
    %v72 = vld [vmem:[%s2 + $0x60] sm:$0xff]
    %v73 = vld [vmem:[%s2 + $0x68] sm:$0xff]
    %v74 = vld [vmem:[%s2 + $0x70] sm:$0xff]
    %v75 = vld [vmem:[%s2 + $0x78] sm:$0xff]
    %77 = vset.pattern.permute.xlu0 0
    %78 = vperm.xlu0 %77, %v60
    %v79 = vpop.permute.xlu0 %78
    %82 = vset.pattern.permute.xlu0 0
    %83 = vperm.xlu0 %82, %v61
    %v84 = vpop.permute.xlu0 %83
    %87 = vset.pattern.permute.xlu0 0
    %88 = vperm.xlu0 %87, %v62
    %v89 = vpop.permute.xlu0 %88
    %92 = vset.pattern.permute.xlu0 0
    %93 = vperm.xlu0 %92, %v63
    %v94 = vpop.permute.xlu0 %93
    %97 = vset.pattern.permute.xlu0 0
    %98 = vperm.xlu0 %97, %v64
    %v99 = vpop.permute.xlu0 %98
    %102 = vset.pattern.permute.xlu0 0
    %103 = vperm.xlu0 %102, %v65
    %v104 = vpop.permute.xlu0 %103
    %107 = vset.pattern.permute.xlu0 0
    %108 = vperm.xlu0 %107, %v66
    %v109 = vpop.permute.xlu0 %108
    %112 = vset.pattern.permute.xlu0 0
    %113 = vperm.xlu0 %112, %v67
    %v114 = vpop.permute.xlu0 %113
    %117 = vset.pattern.permute.xlu0 0
    %118 = vperm.xlu0 %117, %v68
    %v119 = vpop.permute.xlu0 %118
    %122 = vset.pattern.permute.xlu0 0
    %123 = vperm.xlu0 %122, %v69
    %v124 = vpop.permute.xlu0 %123
    %127 = vset.pattern.permute.xlu0 0
    %128 = vperm.xlu0 %127, %v70
    %v129 = vpop.permute.xlu0 %128
    %132 = vset.pattern.permute.xlu0 0
    %133 = vperm.xlu0 %132, %v71
    %v134 = vpop.permute.xlu0 %133
    %137 = vset.pattern.permute.xlu0 0
    %138 = vperm.xlu0 %137, %v72
    %v139 = vpop.permute.xlu0 %138
    %142 = vset.pattern.permute.xlu0 0
    %143 = vperm.xlu0 %142, %v73
    %v144 = vpop.permute.xlu0 %143
    %147 = vset.pattern.permute.xlu0 0
    %148 = vperm.xlu0 %147, %v74
    %v149 = vpop.permute.xlu0 %148
    %152 = vset.pattern.permute.xlu0 0
    %153 = vperm.xlu0 %152, %v75
    %v154 = vpop.permute.xlu0 %153
    %vm156 = vcmask 261120
    %v158 = vsel %vm156, %v44, 0
    %v161 = vsel %vm156, %v45, 0
    %v164 = vsel %vm156, %v46, 0
    %v167 = vsel %vm156, %v47, 0
    %v170 = vsel %vm156, %v48, 0
    %v173 = vsel %vm156, %v49, 0
    %v176 = vsel %vm156, %v50, 0
    %v179 = vsel %vm156, %v51, 0
    %v182 = vsel %vm156, %v52, 0
    %v185 = vsel %vm156, %v53, 0
    %v188 = vsel %vm156, %v54, 0
    %v191 = vsel %vm156, %v55, 0
    %v194 = vsel %vm156, %v56, 0
    %v197 = vsel %vm156, %v57, 0
    %v200 = vsel %vm156, %v58, 0
    %v203 = vsel %vm156, %v59, 0
    %v206 = vsel %vm156, %v28, 0
    %v209 = vsel %vm156, %v29, 0
    %v212 = vsel %vm156, %v30, 0
    %v215 = vsel %vm156, %v31, 0
    %v218 = vsel %vm156, %v32, 0
    %v221 = vsel %vm156, %v33, 0
    %v224 = vsel %vm156, %v34, 0
    %v227 = vsel %vm156, %v35, 0
    %v230 = vsel %vm156, %v36, 0
    %v233 = vsel %vm156, %v37, 0
    %v236 = vsel %vm156, %v38, 0
    %v239 = vsel %vm156, %v39, 0
    %v242 = vsel %vm156, %v40, 0
    %v245 = vsel %vm156, %v41, 0
    %v248 = vsel %vm156, %v42, 0
    %v251 = vsel %vm156, %v43, 0
    %253 = vmatprep.subr.mxu0 0.0
    %254 = vmatpush1.xpose.msra.mxu0 %v251
    %255 = vmatprep.subr.mxu0 0.0
    %256 = vmatpush1.xpose.msra.mxu0 %v248
    %257 = vmatprep.subr.mxu0 0.0
    %258 = vmatpush1.xpose.msra.mxu0 %v245
    %259 = vmatprep.subr.mxu0 0.0
    %260 = vmatpush1.xpose.msra.mxu0 %v242
    %261 = vmatprep.subr.mxu0 0.0
    %262 = vmatpush1.xpose.msra.mxu0 %v239
    %263 = vmatprep.subr.mxu0 0.0
    %264 = vmatpush1.xpose.msra.mxu0 %v236
    %265 = vmatprep.subr.mxu0 0.0
    %266 = vmatpush1.xpose.msra.mxu0 %v233
    %267 = vmatprep.subr.mxu0 0.0
    %268 = vmatpush1.xpose.msra.mxu0 %v230
    %269 = vmatprep.subr.mxu0 0.0
    %270 = vmatpush1.xpose.msra.mxu0 %v227
    %271 = vmatprep.subr.mxu0 0.0
    %272 = vmatpush1.xpose.msra.mxu0 %v224
    %273 = vmatprep.subr.mxu0 0.0
    %274 = vmatpush1.xpose.msra.mxu0 %v221
    %275 = vmatprep.subr.mxu0 0.0
    %276 = vmatpush1.xpose.msra.mxu0 %v218
    %277 = vmatprep.subr.mxu0 0.0
    %278 = vmatpush1.xpose.msra.mxu0 %v215
    %279 = vmatprep.subr.mxu0 0.0
    %280 = vmatpush1.xpose.msra.mxu0 %v212
    %281 = vmatprep.subr.mxu0 0.0
    %282 = vmatpush1.xpose.msra.mxu0 %v209
    %283 = vmatprep.subr.mxu0 0.0
    %284 = vmatpush1.xpose.msra.mxu0 %v206
    %285 = vmatprep.subr.mxu0 0.0
    %286 = vmatpush2.xpose.msra.mxu0 0.0
    %287 = vmatprep.subr.mxu0 0.0
    %288 = vmatpush2.xpose.msra.mxu0 0.0
    %289 = vmatprep.subr.mxu0 0.0
    %290 = vmatpush2.xpose.msra.mxu0 0.0
    %291 = vmatprep.subr.mxu0 0.0
    %292 = vmatpush2.xpose.msra.mxu0 0.0
    %293 = vmatprep.subr.mxu0 0.0
    %294 = vmatpush2.xpose.msra.mxu0 0.0
    %295 = vmatprep.subr.mxu0 0.0
    %296 = vmatpush2.xpose.msra.mxu0 0.0
    %297 = vmatprep.subr.mxu0 0.0
    %298 = vmatpush2.xpose.msra.mxu0 0.0
    %299 = vmatprep.subr.mxu0 0.0
    %300 = vmatpush2.xpose.msra.mxu0 0.0
    %301 = vmatprep.subr.mxu0 0.0
    %302 = vmatpush2.xpose.msra.mxu0 0.0
    %303 = vmatprep.subr.mxu0 0.0
    %304 = vmatpush2.xpose.msra.mxu0 0.0
    %305 = vmatprep.subr.mxu0 0.0
    %306 = vmatpush2.xpose.msra.mxu0 0.0
    %307 = vmatprep.subr.mxu0 0.0
    %308 = vmatpush2.xpose.msra.mxu0 0.0
    %309 = vmatprep.subr.mxu0 0.0
    %310 = vmatpush2.xpose.msra.mxu0 0.0
    %311 = vmatprep.subr.mxu0 0.0
    %312 = vmatpush2.xpose.msra.mxu0 0.0
    %313 = vmatprep.subr.mxu0 0.0
    %314 = vmatpush2.xpose.msra.mxu0 0.0
    %315 = vmatprep.subr.mxu0 0.0
    %316 = vmatpush2.xpose.msra.mxu0 0.0
    %317 = vmatprep.mubr.f32.mxu0 0.0
    %318 = vmatmul.mubr.f32.gmra.mxu0 %v158
    %v319 = vpop.f32.mrf.mxu0
    %v320 = vadd.f32 %v79, %v319
    %v321 = vpop.f32.mrf.mxu0
    %322 = vmatprep.mubr.f32.mxu0 0.0
    %323 = vmatmul.mubr.f32.gmra.mxu0 %v161
    %v324 = vpop.f32.mrf.mxu0
    %v325 = vadd.f32 %v84, %v324
    %v326 = vpop.f32.mrf.mxu0
    %327 = vmatprep.mubr.f32.mxu0 0.0
    %328 = vmatmul.mubr.f32.gmra.mxu0 %v164
    %v329 = vpop.f32.mrf.mxu0
    %v330 = vadd.f32 %v89, %v329
    %v331 = vpop.f32.mrf.mxu0
    %332 = vmatprep.mubr.f32.mxu0 0.0
    %333 = vmatmul.mubr.f32.gmra.mxu0 %v167
    %v334 = vpop.f32.mrf.mxu0
    %v335 = vadd.f32 %v94, %v334
    %v336 = vpop.f32.mrf.mxu0
    %337 = vmatprep.mubr.f32.mxu0 0.0
    %338 = vmatmul.mubr.f32.gmra.mxu0 %v170
    %v339 = vpop.f32.mrf.mxu0
    %v340 = vadd.f32 %v99, %v339
    %v341 = vpop.f32.mrf.mxu0
    %342 = vmatprep.mubr.f32.mxu0 0.0
    %343 = vmatmul.mubr.f32.gmra.mxu0 %v173
    %v344 = vpop.f32.mrf.mxu0
    %v345 = vadd.f32 %v104, %v344
    %v346 = vpop.f32.mrf.mxu0
    %347 = vmatprep.mubr.f32.mxu0 0.0
    %348 = vmatmul.mubr.f32.gmra.mxu0 %v176
    %v349 = vpop.f32.mrf.mxu0
    %v350 = vadd.f32 %v109, %v349
    %v351 = vpop.f32.mrf.mxu0
    %352 = vmatprep.mubr.f32.mxu0 0.0
    %353 = vmatmul.mubr.f32.gmra.mxu0 %v179
    %v354 = vpop.f32.mrf.mxu0
    %v355 = vadd.f32 %v114, %v354
    %v356 = vpop.f32.mrf.mxu0
    %357 = vmatprep.mubr.f32.mxu0 0.0
    %358 = vmatmul.mubr.f32.gmra.mxu0 %v182
    %v359 = vpop.f32.mrf.mxu0
    %v360 = vadd.f32 %v119, %v359
    %v361 = vpop.f32.mrf.mxu0
    %362 = vmatprep.mubr.f32.mxu0 0.0
    %363 = vmatmul.mubr.f32.gmra.mxu0 %v185
    %v364 = vpop.f32.mrf.mxu0
    %v365 = vadd.f32 %v124, %v364
    %v366 = vpop.f32.mrf.mxu0
    %367 = vmatprep.mubr.f32.mxu0 0.0
    %368 = vmatmul.mubr.f32.gmra.mxu0 %v188
    %v369 = vpop.f32.mrf.mxu0
    %v370 = vadd.f32 %v129, %v369
    %v371 = vpop.f32.mrf.mxu0
    %372 = vmatprep.mubr.f32.mxu0 0.0
    %373 = vmatmul.mubr.f32.gmra.mxu0 %v191
    %v374 = vpop.f32.mrf.mxu0
    %v375 = vadd.f32 %v134, %v374
    %v376 = vpop.f32.mrf.mxu0
    %377 = vmatprep.mubr.f32.mxu0 0.0
    %378 = vmatmul.mubr.f32.gmra.mxu0 %v194
    %v379 = vpop.f32.mrf.mxu0
    %v380 = vadd.f32 %v139, %v379
    %v381 = vpop.f32.mrf.mxu0
    %382 = vmatprep.mubr.f32.mxu0 0.0
    %383 = vmatmul.mubr.f32.gmra.mxu0 %v197
    %v384 = vpop.f32.mrf.mxu0
    %v385 = vadd.f32 %v144, %v384
    %v386 = vpop.f32.mrf.mxu0
    %387 = vmatprep.mubr.f32.mxu0 0.0
    %388 = vmatmul.mubr.f32.gmra.mxu0 %v200
    %v389 = vpop.f32.mrf.mxu0
    %v390 = vadd.f32 %v149, %v389
    %v391 = vpop.f32.mrf.mxu0
    %392 = vmatprep.mubr.f32.mxu0 0.0
    %393 = vmatmul.mubr.f32.gmra.mxu0 %v203
    %v394 = vpop.f32.mrf.mxu0
    %v395 = vadd.f32 %v154, %v394
    %v396 = vpop.f32.mrf.mxu0
    %397 = vdwg.mxu0
    %v398 = vmax.f32 %v320, 0.0
    %v399 = vmax.f32 %v325, 0.0
    %v400 = vmax.f32 %v330, 0.0
    %v401 = vmax.f32 %v335, 0.0
    %v402 = vmax.f32 %v340, 0.0
    %v403 = vmax.f32 %v345, 0.0
    %v404 = vmax.f32 %v350, 0.0
    %v405 = vmax.f32 %v355, 0.0
    %v406 = vmax.f32 %v360, 0.0
    %v407 = vmax.f32 %v365, 0.0
    %v408 = vmax.f32 %v370, 0.0
    %v409 = vmax.f32 %v375, 0.0
    %v410 = vmax.f32 %v380, 0.0
    %v411 = vmax.f32 %v385, 0.0
    %v412 = vmax.f32 %v390, 0.0
    %v413 = vmax.f32 %v395, 0.0
    %v414 = vld [vmem:[%s3] sm:$0xff]
    %v415 = vld [vmem:[%s3 + $0x8] sm:$0xff]
    %v416 = vld [vmem:[%s3 + $0x10] sm:$0xff]
    %v417 = vld [vmem:[%s3 + $0x18] sm:$0xff]
    %v418 = vld [vmem:[%s3 + $0x20] sm:$0xff]
    %v419 = vld [vmem:[%s3 + $0x28] sm:$0xff]
    %v420 = vld [vmem:[%s3 + $0x30] sm:$0xff]
    %v421 = vld [vmem:[%s3 + $0x38] sm:$0xff]
    %v422 = vld [vmem:[%s3 + $0x40] sm:$0xff]
    %v423 = vld [vmem:[%s3 + $0x48] sm:$0xff]
    %v424 = vld [vmem:[%s3 + $0x50] sm:$0xff]
    %v425 = vld [vmem:[%s3 + $0x58] sm:$0xff]
    %v426 = vld [vmem:[%s3 + $0x60] sm:$0xff]
    %v427 = vld [vmem:[%s3 + $0x68] sm:$0xff]
    %v428 = vld [vmem:[%s3 + $0x70] sm:$0xff]
    %v429 = vld [vmem:[%s3 + $0x78] sm:$0xff]
    %v430 = vld [vmem:[%s4] sm:$0xff]
    %v431 = vld [vmem:[%s4 + $0x8] sm:$0xff]
    %v432 = vld [vmem:[%s4 + $0x10] sm:$0xff]
    %v433 = vld [vmem:[%s4 + $0x18] sm:$0xff]
    %v434 = vld [vmem:[%s4 + $0x20] sm:$0xff]
    %v435 = vld [vmem:[%s4 + $0x28] sm:$0xff]
    %v436 = vld [vmem:[%s4 + $0x30] sm:$0xff]
    %v437 = vld [vmem:[%s4 + $0x38] sm:$0xff]
    %v438 = vld [vmem:[%s4 + $0x40] sm:$0xff]
    %v439 = vld [vmem:[%s4 + $0x48] sm:$0xff]
    %v440 = vld [vmem:[%s4 + $0x50] sm:$0xff]
    %v441 = vld [vmem:[%s4 + $0x58] sm:$0xff]
    %v442 = vld [vmem:[%s4 + $0x60] sm:$0xff]
    %v443 = vld [vmem:[%s4 + $0x68] sm:$0xff]
    %v444 = vld [vmem:[%s4 + $0x70] sm:$0xff]
    %v445 = vld [vmem:[%s4 + $0x78] sm:$0xff]
    %447 = vset.pattern.permute.xlu0 0
    %448 = vperm.xlu0 %447, %v430
    %v449 = vpop.permute.xlu0 %448
    %452 = vset.pattern.permute.xlu0 0
    %453 = vperm.xlu0 %452, %v431
    %v454 = vpop.permute.xlu0 %453
    %457 = vset.pattern.permute.xlu0 0
    %458 = vperm.xlu0 %457, %v432
    %v459 = vpop.permute.xlu0 %458
    %462 = vset.pattern.permute.xlu0 0
    %463 = vperm.xlu0 %462, %v433
    %v464 = vpop.permute.xlu0 %463
    %467 = vset.pattern.permute.xlu0 0
    %468 = vperm.xlu0 %467, %v434
    %v469 = vpop.permute.xlu0 %468
    %472 = vset.pattern.permute.xlu0 0
    %473 = vperm.xlu0 %472, %v435
    %v474 = vpop.permute.xlu0 %473
    %477 = vset.pattern.permute.xlu0 0
    %478 = vperm.xlu0 %477, %v436
    %v479 = vpop.permute.xlu0 %478
    %482 = vset.pattern.permute.xlu0 0
    %483 = vperm.xlu0 %482, %v437
    %v484 = vpop.permute.xlu0 %483
    %487 = vset.pattern.permute.xlu0 0
    %488 = vperm.xlu0 %487, %v438
    %v489 = vpop.permute.xlu0 %488
    %492 = vset.pattern.permute.xlu0 0
    %493 = vperm.xlu0 %492, %v439
    %v494 = vpop.permute.xlu0 %493
    %497 = vset.pattern.permute.xlu0 0
    %498 = vperm.xlu0 %497, %v440
    %v499 = vpop.permute.xlu0 %498
    %502 = vset.pattern.permute.xlu0 0
    %503 = vperm.xlu0 %502, %v441
    %v504 = vpop.permute.xlu0 %503
    %507 = vset.pattern.permute.xlu0 0
    %508 = vperm.xlu0 %507, %v442
    %v509 = vpop.permute.xlu0 %508
    %512 = vset.pattern.permute.xlu0 0
    %513 = vperm.xlu0 %512, %v443
    %v514 = vpop.permute.xlu0 %513
    %517 = vset.pattern.permute.xlu0 0
    %518 = vperm.xlu0 %517, %v444
    %v519 = vpop.permute.xlu0 %518
    %522 = vset.pattern.permute.xlu0 0
    %523 = vperm.xlu0 %522, %v445
    %v524 = vpop.permute.xlu0 %523
    %526 = vmatprep.subr.mxu0 0.0
    %527 = vmatpush1.msra.mxu0 %v413
    %528 = vmatprep.subr.mxu0 0.0
    %529 = vmatpush1.msra.mxu0 %v412
    %530 = vmatprep.subr.mxu0 0.0
    %531 = vmatpush1.msra.mxu0 %v411
    %532 = vmatprep.subr.mxu0 0.0
    %533 = vmatpush1.msra.mxu0 %v410
    %534 = vmatprep.subr.mxu0 0.0
    %535 = vmatpush1.msra.mxu0 %v409
    %536 = vmatprep.subr.mxu0 0.0
    %537 = vmatpush1.msra.mxu0 %v408
    %538 = vmatprep.subr.mxu0 0.0
    %539 = vmatpush1.msra.mxu0 %v407
    %540 = vmatprep.subr.mxu0 0.0
    %541 = vmatpush1.msra.mxu0 %v406
    %542 = vmatprep.subr.mxu0 0.0
    %543 = vmatpush1.msra.mxu0 %v405
    %544 = vmatprep.subr.mxu0 0.0
    %545 = vmatpush1.msra.mxu0 %v404
    %546 = vmatprep.subr.mxu0 0.0
    %547 = vmatpush1.msra.mxu0 %v403
    %548 = vmatprep.subr.mxu0 0.0
    %549 = vmatpush1.msra.mxu0 %v402
    %550 = vmatprep.subr.mxu0 0.0
    %551 = vmatpush1.msra.mxu0 %v401
    %552 = vmatprep.subr.mxu0 0.0
    %553 = vmatpush1.msra.mxu0 %v400
    %554 = vmatprep.subr.mxu0 0.0
    %555 = vmatpush1.msra.mxu0 %v399
    %556 = vmatprep.subr.mxu0 0.0
    %557 = vmatpush1.msra.mxu0 %v398
    %558 = vmatprep.subr.mxu0 0.0
    %559 = vmatpush2.msra.mxu0 0.0
    %560 = vmatprep.subr.mxu0 0.0
    %561 = vmatpush2.msra.mxu0 0.0
    %562 = vmatprep.subr.mxu0 0.0
    %563 = vmatpush2.msra.mxu0 0.0
    %564 = vmatprep.subr.mxu0 0.0
    %565 = vmatpush2.msra.mxu0 0.0
    %566 = vmatprep.subr.mxu0 0.0
    %567 = vmatpush2.msra.mxu0 0.0
    %568 = vmatprep.subr.mxu0 0.0
    %569 = vmatpush2.msra.mxu0 0.0
    %570 = vmatprep.subr.mxu0 0.0
    %571 = vmatpush2.msra.mxu0 0.0
    %572 = vmatprep.subr.mxu0 0.0
    %573 = vmatpush2.msra.mxu0 0.0
    %574 = vmatprep.subr.mxu0 0.0
    %575 = vmatpush2.msra.mxu0 0.0
    %576 = vmatprep.subr.mxu0 0.0
    %577 = vmatpush2.msra.mxu0 0.0
    %578 = vmatprep.subr.mxu0 0.0
    %579 = vmatpush2.msra.mxu0 0.0
    %580 = vmatprep.subr.mxu0 0.0
    %581 = vmatpush2.msra.mxu0 0.0
    %582 = vmatprep.subr.mxu0 0.0
    %583 = vmatpush2.msra.mxu0 0.0
    %584 = vmatprep.subr.mxu0 0.0
    %585 = vmatpush2.msra.mxu0 0.0
    %586 = vmatprep.subr.mxu0 0.0
    %587 = vmatpush2.msra.mxu0 0.0
    %588 = vmatprep.subr.mxu0 0.0
    %589 = vmatpush2.msra.mxu0 0.0
    %590 = vmatprep.mubr.f32.mxu0 0.0
    %591 = vmatmul.mubr.f32.gmra.mxu0 %v414
    %v592 = vpop.f32.mrf.mxu0
    %v593 = vadd.f32 %v449, %v592
    %v594 = vpop.f32.mrf.mxu0
    %595 = vmatprep.mubr.f32.mxu0 0.0
    %596 = vmatmul.mubr.f32.gmra.mxu0 %v415
    %v597 = vpop.f32.mrf.mxu0
    %v598 = vadd.f32 %v454, %v597
    %v599 = vpop.f32.mrf.mxu0
    %600 = vmatprep.mubr.f32.mxu0 0.0
    %601 = vmatmul.mubr.f32.gmra.mxu0 %v416
    %v602 = vpop.f32.mrf.mxu0
    %v603 = vadd.f32 %v459, %v602
    %v604 = vpop.f32.mrf.mxu0
    %605 = vmatprep.mubr.f32.mxu0 0.0
    %606 = vmatmul.mubr.f32.gmra.mxu0 %v417
    %v607 = vpop.f32.mrf.mxu0
    %v608 = vadd.f32 %v464, %v607
    %v609 = vpop.f32.mrf.mxu0
    %610 = vmatprep.mubr.f32.mxu0 0.0
    %611 = vmatmul.mubr.f32.gmra.mxu0 %v418
    %v612 = vpop.f32.mrf.mxu0
    %v613 = vadd.f32 %v469, %v612
    %v614 = vpop.f32.mrf.mxu0
    %615 = vmatprep.mubr.f32.mxu0 0.0
    %616 = vmatmul.mubr.f32.gmra.mxu0 %v419
    %v617 = vpop.f32.mrf.mxu0
    %v618 = vadd.f32 %v474, %v617
    %v619 = vpop.f32.mrf.mxu0
    %620 = vmatprep.mubr.f32.mxu0 0.0
    %621 = vmatmul.mubr.f32.gmra.mxu0 %v420
    %v622 = vpop.f32.mrf.mxu0
    %v623 = vadd.f32 %v479, %v622
    %v624 = vpop.f32.mrf.mxu0
    %625 = vmatprep.mubr.f32.mxu0 0.0
    %626 = vmatmul.mubr.f32.gmra.mxu0 %v421
    %v627 = vpop.f32.mrf.mxu0
    %v628 = vadd.f32 %v484, %v627
    %v629 = vpop.f32.mrf.mxu0
    %630 = vmatprep.mubr.f32.mxu0 0.0
    %631 = vmatmul.mubr.f32.gmra.mxu0 %v422
    %v632 = vpop.f32.mrf.mxu0
    %v633 = vadd.f32 %v489, %v632
    %v634 = vpop.f32.mrf.mxu0
    %635 = vmatprep.mubr.f32.mxu0 0.0
    %636 = vmatmul.mubr.f32.gmra.mxu0 %v423
    %v637 = vpop.f32.mrf.mxu0
    %v638 = vadd.f32 %v494, %v637
    %v639 = vpop.f32.mrf.mxu0
    %640 = vmatprep.mubr.f32.mxu0 0.0
    %641 = vmatmul.mubr.f32.gmra.mxu0 %v424
    %v642 = vpop.f32.mrf.mxu0
    %v643 = vadd.f32 %v499, %v642
    %v644 = vpop.f32.mrf.mxu0
    %645 = vmatprep.mubr.f32.mxu0 0.0
    %646 = vmatmul.mubr.f32.gmra.mxu0 %v425
    %v647 = vpop.f32.mrf.mxu0
    %v648 = vadd.f32 %v504, %v647
    %v649 = vpop.f32.mrf.mxu0
    %650 = vmatprep.mubr.f32.mxu0 0.0
    %651 = vmatmul.mubr.f32.gmra.mxu0 %v426
    %v652 = vpop.f32.mrf.mxu0
    %v653 = vadd.f32 %v509, %v652
    %v654 = vpop.f32.mrf.mxu0
    %655 = vmatprep.mubr.f32.mxu0 0.0
    %656 = vmatmul.mubr.f32.gmra.mxu0 %v427
    %v657 = vpop.f32.mrf.mxu0
    %v658 = vadd.f32 %v514, %v657
    %v659 = vpop.f32.mrf.mxu0
    %660 = vmatprep.mubr.f32.mxu0 0.0
    %661 = vmatmul.mubr.f32.gmra.mxu0 %v428
    %v662 = vpop.f32.mrf.mxu0
    %v663 = vadd.f32 %v519, %v662
    %v664 = vpop.f32.mrf.mxu0
    %665 = vmatprep.mubr.f32.mxu0 0.0
    %666 = vmatmul.mubr.f32.gmra.mxu0 %v429
    %v667 = vpop.f32.mrf.mxu0
    %v668 = vadd.f32 %v524, %v667
    %v669 = vpop.f32.mrf.mxu0
    %670 = vdwg.mxu0
    %v671 = vmax.f32 %v593, 0.0
    %v672 = vmax.f32 %v598, 0.0
    %v673 = vmax.f32 %v603, 0.0
    %v674 = vmax.f32 %v608, 0.0
    %v675 = vmax.f32 %v613, 0.0
    %v676 = vmax.f32 %v618, 0.0
    %v677 = vmax.f32 %v623, 0.0
    %v678 = vmax.f32 %v628, 0.0
    %v679 = vmax.f32 %v633, 0.0
    %v680 = vmax.f32 %v638, 0.0
    %v681 = vmax.f32 %v643, 0.0
    %v682 = vmax.f32 %v648, 0.0
    %v683 = vmax.f32 %v653, 0.0
    %v684 = vmax.f32 %v658, 0.0
    %v685 = vmax.f32 %v663, 0.0
    %v686 = vmax.f32 %v668, 0.0
    %v687 = vld [vmem:[%s5] sm:$0xff]
    %v688 = vld [vmem:[%s5 + $0x8] sm:$0xff]
    %v689 = vld [vmem:[%s5 + $0x10] sm:$0xff]
    %v690 = vld [vmem:[%s5 + $0x18] sm:$0xff]
    %v691 = vld [vmem:[%s5 + $0x20] sm:$0xff]
    %v692 = vld [vmem:[%s5 + $0x28] sm:$0xff]
    %v693 = vld [vmem:[%s5 + $0x30] sm:$0xff]
    %v694 = vld [vmem:[%s5 + $0x38] sm:$0xff]
    %v695 = vld [vmem:[%s5 + $0x40] sm:$0xff]
    %v696 = vld [vmem:[%s5 + $0x48] sm:$0xff]
    %v697 = vld [vmem:[%s5 + $0x50] sm:$0xff]
    %v698 = vld [vmem:[%s5 + $0x58] sm:$0xff]
    %v699 = vld [vmem:[%s5 + $0x60] sm:$0xff]
    %v700 = vld [vmem:[%s5 + $0x68] sm:$0xff]
    %v701 = vld [vmem:[%s5 + $0x70] sm:$0xff]
    %v702 = vld [vmem:[%s5 + $0x78] sm:$0xff]
    %704 = vset.pattern.permute.xlu0 0
    %705 = vperm.xlu0 %704, %v687
    %v706 = vpop.permute.xlu0 %705
    %709 = vset.pattern.permute.xlu0 0
    %710 = vperm.xlu0 %709, %v688
    %v711 = vpop.permute.xlu0 %710
    %714 = vset.pattern.permute.xlu0 0
    %715 = vperm.xlu0 %714, %v689
    %v716 = vpop.permute.xlu0 %715
    %719 = vset.pattern.permute.xlu0 0
    %720 = vperm.xlu0 %719, %v690
    %v721 = vpop.permute.xlu0 %720
    %724 = vset.pattern.permute.xlu0 0
    %725 = vperm.xlu0 %724, %v691
    %v726 = vpop.permute.xlu0 %725
    %729 = vset.pattern.permute.xlu0 0
    %730 = vperm.xlu0 %729, %v692
    %v731 = vpop.permute.xlu0 %730
    %734 = vset.pattern.permute.xlu0 0
    %735 = vperm.xlu0 %734, %v693
    %v736 = vpop.permute.xlu0 %735
    %739 = vset.pattern.permute.xlu0 0
    %740 = vperm.xlu0 %739, %v694
    %v741 = vpop.permute.xlu0 %740
    %744 = vset.pattern.permute.xlu0 0
    %745 = vperm.xlu0 %744, %v695
    %v746 = vpop.permute.xlu0 %745
    %749 = vset.pattern.permute.xlu0 0
    %750 = vperm.xlu0 %749, %v696
    %v751 = vpop.permute.xlu0 %750
    %754 = vset.pattern.permute.xlu0 0
    %755 = vperm.xlu0 %754, %v697
    %v756 = vpop.permute.xlu0 %755
    %759 = vset.pattern.permute.xlu0 0
    %760 = vperm.xlu0 %759, %v698
    %v761 = vpop.permute.xlu0 %760
    %764 = vset.pattern.permute.xlu0 0
    %765 = vperm.xlu0 %764, %v699
    %v766 = vpop.permute.xlu0 %765
    %769 = vset.pattern.permute.xlu0 0
    %770 = vperm.xlu0 %769, %v700
    %v771 = vpop.permute.xlu0 %770
    %774 = vset.pattern.permute.xlu0 0
    %775 = vperm.xlu0 %774, %v701
    %v776 = vpop.permute.xlu0 %775
    %779 = vset.pattern.permute.xlu0 0
    %780 = vperm.xlu0 %779, %v702
    %v781 = vpop.permute.xlu0 %780
    %v783 = vmul.f32 %v671, %v706
    %v784 = vmul.f32 %v672, %v711
    %v785 = vmul.f32 %v673, %v716
    %v786 = vmul.f32 %v674, %v721
    %v787 = vmul.f32 %v675, %v726
    %v788 = vmul.f32 %v676, %v731
    %v789 = vmul.f32 %v677, %v736
    %v790 = vmul.f32 %v678, %v741
    %v791 = vmul.f32 %v679, %v746
    %v792 = vmul.f32 %v680, %v751
    %v793 = vmul.f32 %v681, %v756
    %v794 = vmul.f32 %v682, %v761
    %v795 = vmul.f32 %v683, %v766
    %v796 = vmul.f32 %v684, %v771
    %v797 = vmul.f32 %v685, %v776
    %v798 = vmul.f32 %v686, %v781
    %v799 = vadd.f32 %v783, %v784
    %v800 = vadd.f32 %v799, %v785
    %v801 = vadd.f32 %v800, %v786
    %v802 = vadd.f32 %v801, %v787
    %v803 = vadd.f32 %v802, %v788
    %v804 = vadd.f32 %v803, %v789
    %v805 = vadd.f32 %v804, %v790
    %v806 = vadd.f32 %v805, %v791
    %v807 = vadd.f32 %v806, %v792
    %v808 = vadd.f32 %v807, %v793
    %v809 = vadd.f32 %v808, %v794
    %v810 = vadd.f32 %v809, %v795
    %v811 = vadd.f32 %v810, %v796
    %v812 = vadd.f32 %v811, %v797
    %v813 = vadd.f32 %v812, %v798
    %v814 = vrot.slane %v813, 4
    %v815 = vadd.f32 %v813, %v814
    %v816 = vrot.slane %v815, 2
    %v817 = vadd.f32 %v815, %v816
    %v818 = vrot.slane %v817, 1
    %v819 = vadd.f32 %v817, %v818
    %s820 = sld [smem:[#allocation2]]
    %v821 = vstv %s820
    %v822 = vadd.f32 %v819, %v821
    %823 = vst [vmem:[#allocation3] sm:$0x1] %v822
    // Predicated region
    $region30: #{tpu_custom_call.1} parent=1 // pred_check
      _
    $region31: #{tpu_custom_call.1} parent=1 // pred_check_branch
      %825 = sbr.rel (0) target = $region33
    $region32: #{tpu_custom_call.1} parent=1 // pred_region
      %s827 = ssub.s32 16, 16
      %828 = vsyncadd [#allocation4], %s827
      %s830 = sshll.u32 [#allocation3], 4
      %s831 = int_to_ptr.vmem [resolvable:$true] %s830
      %833 = dma.vmem_to_hbm [thread:$0]  %s831, 16, %s7, [#allocation4]
    $region33: #{tpu_custom_call.1} parent=1 // pred_fallthru
      _
    // Predicated region
    $region34: #{tpu_custom_call.1} parent=1 // pred_check
      _
    $region35: #{tpu_custom_call.1} parent=1 // pred_check_branch
      %835 = sbr.rel (0) target = $region37
    $region36: #{tpu_custom_call.1} parent=1 // pred_region
      %836 = dma.done [#allocation4], 16
    $region37: #{tpu_custom_call.1} parent=1 // pred_fallthru
      _
    %837 = vsyncpa [#allocation4], 1

</llo_original>
